<compile_context>
chip_gen: v6e
topology: v6e:2x2x1
jax: 0.10.0
libtpu: 0.0.40
codegen_flags: <defaults>
</compile_context>

<pallas_src>
import functools

import jax
import jax.numpy as jnp
from jax.experimental import pallas as pl
from jax.experimental.pallas import tpu as pltpu


def _sdpa_kernel(q_ref, k_ref, v_ref, mask_ref, kmask_ref, *out_refs,
                 temperature, return_attn):
    # Block shapes:
    #   q:     (Bblk, tq, Dk)      k: (Bblk, Lk, Dk)     v: (Bblk, Lk, Dv)
    #   mask:  (Bblk, tq or 1, Lk) kmask: (Bblk, tq, 1 or Dv)
    out_ref = out_refs[0]
    attn_ref = out_refs[1] if return_attn else None

    q = q_ref[...]
    k = k_ref[...]
    v = v_ref[...]
    mask = mask_ref[...]
    kmask = kmask_ref[...]

    # Fold 1/temperature into q: touches Lq*Dk elements instead of Lq*Lk scores.
    q = q * jnp.asarray(1.0 / temperature, q.dtype)

    # scores = q @ k^T, contraction on the last (lane) dim of BOTH operands:
    # no XLU transpose, fp32 MXU accumulation.
    scores = jax.lax.dot_general(
        q, k,
        dimension_numbers=(((2,), (2,)), ((0,), (0,))),
        preferred_element_type=jnp.float32)            # (Bblk, tq, Lk) fp32

    # masked_fill(mask, -inf) -- fully-masked rows become NaN, like torch.
    scores = jnp.where(mask != 0, -jnp.inf, scores)

    # softmax over the key axis (torch dim=2), fp32 throughout.
    m = jnp.max(scores, axis=-1, keepdims=True)
    e = jnp.exp(scores - m)
    s = jnp.sum(e, axis=-1, keepdims=True)
    attn = e * pl.reciprocal(s, approx=False)          # exact, for 1e-5 parity

    # out = attn @ v, then masked_fill(k_mask, 0); kmask broadcasts over Dv.
    out = jax.lax.dot_general(
        attn.astype(v.dtype), v,
        dimension_numbers=(((2,), (1,)), ((0,), (0,))),
        preferred_element_type=jnp.float32)            # (Bblk, tq, Dv) fp32
    out = jnp.where(kmask != 0, 0.0, out)

    out_ref[...] = out.astype(out_ref.dtype)
    if return_attn:
        attn_ref[...] = attn.astype(attn_ref.dtype)


def _largest_divisor(n, cap, ok=lambda d: True):
    cap = max(1, min(n, cap))
    for d in range(cap, 0, -1):
        if n % d == 0 and ok(d):
            return d
    return 1


def _vmem_capacity_bytes():
    try:
        info = pltpu.get_tpu_info()
        cap = getattr(info, "vmem_capacity_bytes", None)
        if cap:
            return int(cap)
    except Exception:
        pass
    return 64 << 20            # assume the smallest generation (v7x) if unknown


def scaled_dot_product_attention2(q, k, v, mask, k_mask, temperature, *,
                                  return_attn=True, attn_dtype=None,
                                  compute_dtype=None):
    """q: (B, Lq, Dk), k: (B, Lk, Dk), v: (B, Lk, Dv).
    mask: dense (B, Lq, Lk) or compact key-padding (B, Lk) / (B, 1, Lk);
          nonzero entries get -inf before softmax (fully-masked rows -> NaN).
    k_mask: (B, Lq), (B, Lq, 1) or (B, Lq, Dv); nonzero zeroes the output element.
    compute_dtype=jnp.bfloat16 halves q/k/v HBM traffic and uses the bf16 MXU
    path on every generation (softmax stays fp32); return_attn=False removes
    the (B, Lq, Lk) attention writeback, the largest HBM stream."""
    B, Lq, Dk = q.shape
    _, Lk, _ = k.shape
    Dv = v.shape[-1]
    out_dtype = q.dtype
    if attn_dtype is None:
        attn_dtype = out_dtype

    if compute_dtype is not None:
        q = q.astype(compute_dtype)
        k = k.astype(compute_dtype)
        v = v.astype(compute_dtype)

    # Compact int8 masks: 4x fewer HBM bytes than int32/bool32.
    if mask.ndim == 2:                      # (B, Lk) key-padding mask
        mask = mask[:, None, :]
    mask = mask.astype(jnp.int8)
    mask_compact = mask.shape[1] == 1       # broadcast over queries in-kernel

    if k_mask.ndim == 2:                    # (B, Lq) -> (B, Lq, 1)
        k_mask = k_mask[..., None]
    k_mask = k_mask.astype(jnp.int8)
    kml = k_mask.shape[-1]                  # 1 (compact) or Dv (full)

    itm = q.dtype.itemsize
    out_itm = jnp.dtype(out_dtype).itemsize
    attn_itm = jnp.dtype(attn_dtype).itemsize

    def step_bytes(bblk, tq):
        mq = 1 if mask_compact else tq
        per = bblk * (
            2 * tq * Dk * itm               # q block (double-buffered)
            + Lk * Dk * itm                 # k (resident across query tiles)
            + Lk * Dv * itm                 # v (resident across query tiles)
            + 2 * mq * Lk                   # mask, int8
            + 2 * tq * kml                  # k_mask, int8
            + 2 * tq * Dv * out_itm         # out block (double-buffered)
            + (2 * tq * Lk * attn_itm if return_attn else 0)
            # fp32 compiler intermediates: scores, e, attn + fp32 out acc
            + 3 * tq * Lk * 4
            + tq * Dv * 4)
        return per

    # Per-generation VMEM sizing: 128 MiB on v5e/v6e, 64 MiB on v7x.
    vmem_cap = _vmem_capacity_bytes()
    vmem_limit = min(96 << 20, (vmem_cap * 3) // 4)    # ~96 MiB v5e/v6e, ~48 MiB v7x
    budget = vmem_limit // 3                           # ~32 MiB / ~16 MiB per step

    # Query tile first (MXU M dim): full Lq if it fits, else the largest divisor
    # aligned to 32 (int8-mask sublane packing), then 16, then 8.
    if step_bytes(1, Lq) <= budget:
        tq = Lq
    else:
        tq = None
        for align in (32, 16, 8):
            d = _largest_divisor(
                Lq, Lq - 1,
                lambda t, a=align: t % a == 0 and step_bytes(1, t) <= budget)
            if d >= align and d % align == 0:
                tq = d
                break
        if tq is None:
            # Nothing fits the budget: take the largest aligned divisor anyway
            # and widen the compiler VMEM limit below (never exceed it silently).
            for align in (32, 16, 8):
                d = _largest_divisor(Lq, Lq - 1, lambda t, a=align: t % a == 0)
                if d >= align and d % align == 0:
                    tq = d
                    break
        if tq is None:
            tq = Lq                          # full extent is always legal

    # Batch block second.
    bblk = _largest_divisor(B, B, lambda d: step_bytes(d, tq) <= budget)

    # Keep >= 2 grid iterations on a 'parallel' axis so both v7x TCs get work.
    if (B // bblk) * (Lq // tq) < 2:
        if B >= 2:
            bblk = _largest_divisor(B, B // 2)
        elif Lq // tq < 2:
            half = _largest_divisor(Lq, Lq // 2, lambda t: t % 8 == 0)
            if half >= 8 and half % 8 == 0:
                tq = half

    # Never hand the compiler a limit smaller than the tile we actually picked.
    needed = step_bytes(bblk, tq)
    vmem_limit = int(min(max(vmem_limit, needed + (needed >> 2)),
                         (vmem_cap * 9) // 10))

    grid = (B // bblk, Lq // tq)
    mq = 1 if mask_compact else tq
    mask_map = (lambda b, i: (b, 0, 0)) if mask_compact else (lambda b, i: (b, i, 0))

    kernel = functools.partial(_sdpa_kernel, temperature=float(temperature),
                               return_attn=return_attn)

    in_specs = [
        pl.BlockSpec((bblk, tq, Dk), lambda b, i: (b, i, 0)),    # q
        pl.BlockSpec((bblk, Lk, Dk), lambda b, i: (b, 0, 0)),    # k (resident over i)
        pl.BlockSpec((bblk, Lk, Dv), lambda b, i: (b, 0, 0)),    # v (resident over i)
        pl.BlockSpec((bblk, mq, Lk), mask_map),                  # mask (int8)
        pl.BlockSpec((bblk, tq, kml), lambda b, i: (b, i, 0)),   # k_mask (int8)
    ]
    out_spec_o = pl.BlockSpec((bblk, tq, Dv), lambda b, i: (b, i, 0))
    if return_attn:
        out_shape = (jax.ShapeDtypeStruct((B, Lq, Dv), out_dtype),
                     jax.ShapeDtypeStruct((B, Lq, Lk), attn_dtype))
        out_specs = [out_spec_o,
                     pl.BlockSpec((bblk, tq, Lk), lambda b, i: (b, i, 0))]
    else:
        out_shape = jax.ShapeDtypeStruct((B, Lq, Dv), out_dtype)
        out_specs = out_spec_o

    grid_spec = pltpu.PrefetchScalarGridSpec(
        num_scalar_prefetch=0,
        grid=grid,
        in_specs=in_specs,
        out_specs=out_specs)

    return pl.pallas_call(
        kernel,
        out_shape=out_shape,
        grid_spec=grid_spec,
        compiler_params=pltpu.CompilerParams(
            dimension_semantics=("parallel", "parallel"),
            vmem_limit_bytes=int(vmem_limit)),
    )(q, k, v, mask, k_mask)


def _reference(q, k, v, mask, k_mask, temperature):
    attn = jnp.einsum("bqd,bkd->bqk", q, k) / temperature
    attn = jnp.where(mask != 0, -jnp.inf, attn)
    attn = jax.nn.softmax(attn, axis=2)
    out = jnp.einsum("bqk,bkd->bqd", attn, v)
    out = jnp.where(k_mask != 0, 0.0, out)
    return out, attn


if __name__ == "__main__":
    # Small shapes consistent with the module's bmm-based forward.
    B, Lq, Lk, Dk, Dv = 2, 8, 8, 32, 32
    temperature = float(Dk) ** 0.5

    key = jax.random.PRNGKey(0)
    kq, kk, kv, km, kkm = jax.random.split(key, 5)

    q = jax.random.normal(kq, (B, Lq, Dk), dtype=jnp.float32)
    k = jax.random.normal(kk, (B, Lk, Dk), dtype=jnp.float32)
    v = jax.random.normal(kv, (B, Lk, Dv), dtype=jnp.float32)

    # mask: block a few (query, key) pairs, never a full row (avoids NaN rows).
    mask = (jax.random.uniform(km, (B, Lq, Lk)) < 0.2).astype(jnp.int8)
    mask = mask.at[:, :, 0].set(0)
    # k_mask: compact per-query form (B, Lq, 1); broadcasts over Dv like torch masked_fill.
    k_mask = (jax.random.uniform(kkm, (B, Lq, 1)) < 0.25).astype(jnp.int8)

    out, attn = scaled_dot_product_attention2(q, k, v, mask, k_mask, temperature)
    out = jax.block_until_ready(out)
    attn = jax.block_until_ready(attn)

    ref_out, ref_attn = _reference(q, k, v, mask, k_mask, temperature)
    assert jnp.allclose(out, ref_out, atol=1e-5, rtol=1e-5)
    assert jnp.allclose(attn, ref_attn, atol=1e-5, rtol=1e-5)

    print("KERNEL_OK")
</pallas_src>

<mosaic_0001>
module attributes {stable_mosaic.version = 11 : i64} {
  func.func @_sdpa_kernel(%arg0: i32, %arg1: i32, %arg2: memref<1x8x32xf32, #tpu.memory_space<vmem>>, %arg3: memref<1x8x32xf32, #tpu.memory_space<vmem>>, %arg4: memref<1x8x32xf32, #tpu.memory_space<vmem>>, %arg5: memref<1x8x8xi8, #tpu.memory_space<vmem>>, %arg6: memref<1x8x1xi8, #tpu.memory_space<vmem>>, %arg7: memref<1x8x32xf32, #tpu.memory_space<vmem>>, %arg8: memref<1x8x8xf32, #tpu.memory_space<vmem>>) attributes {dimension_semantics = [#tpu.dimension_semantics<parallel>, #tpu.dimension_semantics<parallel>], iteration_bounds = array<i64: 2, 1>, scalar_prefetch = 0 : i64, scratch_operands = 0 : i64, tpu.core_type = #tpu.core_type<tc>, window_params = [{transform_indices = @transform_0, window_bounds = array<i64: 1, 8, 32>}, {transform_indices = @transform_1, window_bounds = array<i64: 1, 8, 32>}, {transform_indices = @transform_2, window_bounds = array<i64: 1, 8, 32>}, {transform_indices = @transform_3, window_bounds = array<i64: 1, 8, 8>}, {transform_indices = @transform_4, window_bounds = array<i64: 1, 8, 1>}, {transform_indices = @transform_5, window_bounds = array<i64: 1, 8, 32>}, {transform_indices = @transform_6, window_bounds = array<i64: 1, 8, 8>}]} {
    %c0 = arith.constant 0 : index
    %c0_0 = arith.constant 0 : index
    %c0_1 = arith.constant 0 : index
    %0 = vector.load %arg2[%c0, %c0_0, %c0_1] : memref<1x8x32xf32, #tpu.memory_space<vmem>>, vector<1x8x32xf32>
    %c0_2 = arith.constant 0 : index
    %c0_3 = arith.constant 0 : index
    %c0_4 = arith.constant 0 : index
    %1 = vector.load %arg3[%c0_2, %c0_3, %c0_4] : memref<1x8x32xf32, #tpu.memory_space<vmem>>, vector<1x8x32xf32>
    %c0_5 = arith.constant 0 : index
    %c0_6 = arith.constant 0 : index
    %c0_7 = arith.constant 0 : index
    %2 = vector.load %arg4[%c0_5, %c0_6, %c0_7] : memref<1x8x32xf32, #tpu.memory_space<vmem>>, vector<1x8x32xf32>
    %c0_8 = arith.constant 0 : index
    %c0_9 = arith.constant 0 : index
    %c0_10 = arith.constant 0 : index
    %3 = vector.load %arg5[%c0_8, %c0_9, %c0_10] : memref<1x8x8xi8, #tpu.memory_space<vmem>>, vector<1x8x8xi8>
    %c0_11 = arith.constant 0 : index
    %c0_12 = arith.constant 0 : index
    %c0_13 = arith.constant 0 : index
    %4 = vector.load %arg6[%c0_11, %c0_12, %c0_13] : memref<1x8x1xi8, #tpu.memory_space<vmem>>, vector<1x8x1xi8>
    %cst = arith.constant 0.176776692 : f32
    %5 = vector.broadcast %cst : f32 to vector<1x8x32xf32>
    %6 = arith.mulf %0, %5 : vector<1x8x32xf32>
    %cst_14 = arith.constant dense<0.000000e+00> : vector<1x8x8xf32>
    %7 = tpu.matmul %6, %1, %cst_14 {dimension_numbers = #tpu.dot_dimension_numbers<[2], [2], [1], [1], [0, 0, 0, 1, 1, 1], [0], [0]>} : vector<1x8x32xf32>, vector<1x8x32xf32>, vector<1x8x8xf32> -> vector<1x8x8xf32>
    %c0_i8 = arith.constant 0 : i8
    %8 = vector.broadcast %c0_i8 : i8 to vector<1x8x8xi8>
    %9 = arith.cmpi ne, %3, %8 : vector<1x8x8xi8>
    %cst_15 = arith.constant 0xFF800000 : f32
    %10 = vector.broadcast %cst_15 : f32 to vector<1x8x8xf32>
    %11 = arith.select %9, %10, %7 : vector<1x8x8xi1>, vector<1x8x8xf32>
    %cst_16 = arith.constant dense<0xFF800000> : vector<1x8xf32>
    %12 = vector.multi_reduction <maximumf>, %11, %cst_16 [2] : vector<1x8x8xf32> to vector<1x8xf32>
    %13 = vector.shape_cast %12 : vector<1x8xf32> to vector<1x8x1xf32>
    %14 = vector.broadcast %13 : vector<1x8x1xf32> to vector<1x8x8xf32>
    %15 = arith.subf %11, %14 : vector<1x8x8xf32>
    %16 = math.exp %15 : vector<1x8x8xf32>
    %cst_17 = arith.constant dense<0.000000e+00> : vector<1x8xf32>
    %17 = vector.multi_reduction <add>, %16, %cst_17 [2] : vector<1x8x8xf32> to vector<1x8xf32>
    %18 = vector.shape_cast %17 : vector<1x8xf32> to vector<1x8x1xf32>
    %19 = tpu.reciprocal %18 : vector<1x8x1xf32> -> vector<1x8x1xf32>
    %20 = vector.broadcast %19 : vector<1x8x1xf32> to vector<1x8x8xf32>
    %21 = arith.mulf %16, %20 : vector<1x8x8xf32>
    %cst_18 = arith.constant dense<0.000000e+00> : vector<1x8x32xf32>
    %22 = tpu.matmul %21, %2, %cst_18 {dimension_numbers = #tpu.dot_dimension_numbers<[2], [1], [1], [2], [0, 0, 0, 1, 1, 2], [0], [0]>} : vector<1x8x8xf32>, vector<1x8x32xf32>, vector<1x8x32xf32> -> vector<1x8x32xf32>
    %c0_i8_19 = arith.constant 0 : i8
    %23 = vector.broadcast %c0_i8_19 : i8 to vector<1x8x1xi8>
    %24 = arith.cmpi ne, %4, %23 : vector<1x8x1xi8>
    %cst_20 = arith.constant 0.000000e+00 : f32
    %25 = vector.shape_cast %24 : vector<1x8x1xi1> to vector<1x8x1xi1>
    %26 = vector.broadcast %25 : vector<1x8x1xi1> to vector<1x8x32xi1>
    %27 = vector.broadcast %cst_20 : f32 to vector<1x8x32xf32>
    %28 = arith.select %26, %27, %22 : vector<1x8x32xi1>, vector<1x8x32xf32>
    %c0_21 = arith.constant 0 : index
    %c0_22 = arith.constant 0 : index
    %c0_23 = arith.constant 0 : index
    %29 = vector.load %arg7[%c0_21, %c0_22, %c0_23] : memref<1x8x32xf32, #tpu.memory_space<vmem>>, vector<1x8x32xf32>
    tpu.vector_store %arg7[%c0_21, %c0_22, %c0_23], %28 {strides = array<i32>} : memref<1x8x32xf32, #tpu.memory_space<vmem>>, vector<1x8x32xf32>,
    %c0_24 = arith.constant 0 : index
    %c0_25 = arith.constant 0 : index
    %c0_26 = arith.constant 0 : index
    %30 = vector.load %arg8[%c0_24, %c0_25, %c0_26] : memref<1x8x8xf32, #tpu.memory_space<vmem>>, vector<1x8x8xf32>
    tpu.vector_store %arg8[%c0_24, %c0_25, %c0_26], %21 {strides = array<i32>} : memref<1x8x8xf32, #tpu.memory_space<vmem>>, vector<1x8x8xf32>,
    return
  }
  func.func @transform_0(%arg0: i32, %arg1: i32) -> (i32, i32, i32) {
    %c0_i32 = arith.constant 0 : i32
    %c0_i32_0 = arith.constant 0 : i32
    return %arg0, %arg1, %c0_i32 : i32, i32, i32
  }
  func.func @transform_1(%arg0: i32, %arg1: i32) -> (i32, i32, i32) {
    %c0_i32 = arith.constant 0 : i32
    %c0_i32_0 = arith.constant 0 : i32
    %c0_i32_1 = arith.constant 0 : i32
    return %arg0, %c0_i32, %c0_i32_0 : i32, i32, i32
  }
  func.func @transform_2(%arg0: i32, %arg1: i32) -> (i32, i32, i32) {
    %c0_i32 = arith.constant 0 : i32
    %c0_i32_0 = arith.constant 0 : i32
    %c0_i32_1 = arith.constant 0 : i32
    return %arg0, %c0_i32, %c0_i32_0 : i32, i32, i32
  }
  func.func @transform_3(%arg0: i32, %arg1: i32) -> (i32, i32, i32) {
    %c0_i32 = arith.constant 0 : i32
    %c0_i32_0 = arith.constant 0 : i32
    return %arg0, %arg1, %c0_i32 : i32, i32, i32
  }
  func.func @transform_4(%arg0: i32, %arg1: i32) -> (i32, i32, i32) {
    %c0_i32 = arith.constant 0 : i32
    %c0_i32_0 = arith.constant 0 : i32
    return %arg0, %arg1, %c0_i32 : i32, i32, i32
  }
  func.func @transform_5(%arg0: i32, %arg1: i32) -> (i32, i32, i32) {
    %c0_i32 = arith.constant 0 : i32
    %c0_i32_0 = arith.constant 0 : i32
    return %arg0, %arg1, %c0_i32 : i32, i32, i32
  }
  func.func @transform_6(%arg0: i32, %arg1: i32) -> (i32, i32, i32) {
    %c0_i32 = arith.constant 0 : i32
    %c0_i32_0 = arith.constant 0 : i32
    return %arg0, %arg1, %c0_i32 : i32, i32, i32
  }
}

</mosaic_0001>

<llo_original>
// kernel: tpu_custom_call.1
$region0: #{tpu_custom_call.1}
  #allocation0 [shape = 'u32[]', space=smem, size = 0x4, offset = 0x4, fixed_abs, tag = 'smem constant byte address 0x4 - core index']
  #allocation1 [shape = 'u32[144,128]{1,0:T(1,128)}', space=vmem, size = 0x12000, scoped, tag = 'internal scratch']
  %s0 = inlined_call_operand.hbm [shape: f32[2,8,32], index: 0, kind: input, shape index: {}]
  %s1 = inlined_call_operand.hbm [shape: f32[2,8,32], index: 1, kind: input, shape index: {}]
  %s2 = inlined_call_operand.hbm [shape: f32[2,8,32], index: 2, kind: input, shape index: {}]
  %s3 = inlined_call_operand.vmem [shape: s8[2,8,8], index: 3, kind: input, shape index: {}]
  %s4 = inlined_call_operand.vmem [shape: s8[2,8,1], index: 4, kind: input, shape index: {}]
  %s5 = inlined_call_operand.hbm [shape: f32[2,8,32], index: 5, kind: output, shape index: {0}]
  %s6 = inlined_call_operand.hbm [shape: f32[2,8,8], index: 6, kind: output, shape index: {1}]
  %7 = xla_tuple %s5, %s6
  %s8 = sld [smem:[#allocation0]]
  $region73: #{tpu_custom_call.1} parent=0
    _
  %s10 = ssub.s32 1, %s8
  %s11 = scalar_select 0, %s10, %s8
  $region1: #{tpu_custom_call.1} parent=0
    #allocation2 [shape = 'u8[8192]{0}', space=vmem, size = 0x2000, scoped, tag = 'input window, operand 0']
    #allocation3 [shape = 's32[2]{0}', space=sflag, size = 0x8, scoped, tag = 'scoped memory for tpu_custom_call.1']
    #allocation4 [shape = 's32[2]{0}', space=sflag, size = 0x8, scoped, tag = 'scoped memory for tpu_custom_call.1']
    #allocation5 [shape = 'u8[8192]{0}', space=vmem, size = 0x2000, scoped, tag = 'input window, operand 1']
    #allocation6 [shape = 's32[2]{0}', space=sflag, size = 0x8, scoped, tag = 'scoped memory for tpu_custom_call.1']
    #allocation7 [shape = 'u8[8192]{0}', space=vmem, size = 0x2000, scoped, tag = 'input window, operand 2']
    #allocation8 [shape = 'u8[8192]{0}', space=vmem, size = 0x2000, scoped, tag = 'output window, operand 0']
    #allocation9 [shape = 'u8[8192]{0}', space=vmem, size = 0x2000, scoped, tag = 'output window, operand 1']
    #allocation10 [shape = 's32[2]{0}', space=sflag, size = 0x8, scoped, tag = 'scoped memory for tpu_custom_call.1']
    %12 = vsyncpa [#allocation3], 0
    %s13 = scalar_lea.sflag [#allocation3], 1
    %14 = vsyncpa %s13, 0
    %15 = vsyncpa [#allocation6], 0
    %s16 = scalar_lea.sflag [#allocation6], 1
    %17 = vsyncpa %s16, 0
    %18 = vsyncpa [#allocation4], 0
    %s19 = scalar_lea.sflag [#allocation4], 1
    %20 = vsyncpa %s19, 0
    %21 = vsyncpa [#allocation10], 0
    %s22 = scalar_lea.sflag [#allocation10], 1
    %23 = vsyncpa %s22, 0
    loop: start=0, step=1, limit=4
    $region2: #{tpu_custom_call.1} parent=1 // loop_pre_header
      _
    $region3: #{tpu_custom_call.1} parent=1 // loop_header
      %s25 = sphi 0, %s29
      %p26 = scmp.ge.s32.totalorder %s25, 4
      %s32 = sphi 0, %s44
      %s33 = sphi 0, %s40
      %s34 = sphi 0, %s32
      %s35 = sphi 0, %s33
      %s36 = sphi 0, %s34
      %s37 = sphi 0, %s35
      %s49 = sphi 0, %s51
      %s52 = sphi 0, %s49
      %s53 = sphi 0, %s52
      %s69 = sphi 0, %s53
      %s75 = sphi 0, %s77
      %s78 = sphi 0, %s75
      %s79 = sphi 0, %s78
      %s95 = sphi 0, %s79
      %s101 = sphi 0, %s103
      %s104 = sphi 0, %s101
      %s105 = sphi 0, %s104
      %s121 = sphi 0, %s105
      %s129 = sphi 0, %s131
      %s132 = sphi 0, %s129
      %s133 = sphi 0, %s132
      %s149 = sphi 0, %s133
      %s157 = sphi 0, %s159
      %s160 = sphi 0, %s157
      %s161 = sphi 0, %s160
      %s177 = sphi 0, %s161
      %s185 = sphi 0, %s187
      %s188 = sphi 0, %s185
      %s189 = sphi 0, %s188
      %s205 = sphi 0, %s189
      %s213 = sphi 0, %s215
      %s216 = sphi 0, %s213
      %s217 = sphi 0, %s216
      %s233 = sphi 0, %s217
    $region4: #{tpu_custom_call.1} parent=1 // loop_header_branch
      %28 = sbr.rel (%p26) target = $region8
    $region5: #{tpu_custom_call.1} parent=1 // loop_body
      %s30 = ssub.s32 %s25, 1
      %s31 = ssub.s32 %s25, 2
      %s38 = sadd.s32 1, %s33
      %p39 = scmp.ge.s32.totalorder %s38, 1
      %s40 = scalar_select %p39, 0, %s38
      %s41 = sadd.s32 1, %s32
      %s42 = scalar_select %p39, %s41, %s32
      %p43 = scmp.ge.s32.totalorder %s42, 2
      %s44 = scalar_select %p43, 0, %s42
      %s45 = ssub.s32 %s32, %s44
      %s46 = ssub.s32 %s33, %s40
      %s47 = sor.u32 %s45, %s46
      %p48 = scmp.eq.s32.totalorder %s47, 0
      %s50 = sadd.s32 %s49, 1
      %s51 = scalar_select %p48, %s49, %s50
      %p54 = pneg %p48
      %p55 = scmp.eq.s32.totalorder %s25, 1
      %p56 = por %p54, %p55
      %p57 = scmp.ne.s32.totalorder %s49, %s52
      %p58 = scmp.eq.s32.totalorder %s25, 0
      %p59 = por %p57, %p58
      %p60 = scmp.ne.s32.totalorder %s49, %s52
      %p61 = scmp.eq.s32.totalorder %s30, 1
      %p62 = por %p60, %p61
      %p63 = scmp.ne.s32.totalorder %s52, %s53
      %p64 = scmp.eq.s32.totalorder %s30, 0
      %p65 = por %p63, %p64
      %p66 = scmp.ne.s32.totalorder %s52, %s53
      %p67 = scmp.eq.s32.totalorder %s31, 1
      %p68 = por %p66, %p67
      %p70 = scmp.ne.s32.totalorder %s53, %s69
      %p71 = scmp.eq.s32.totalorder %s31, 0
      %p72 = por %p70, %p71
      %s73 = ssub.s32 %s32, %s44
      %p74 = scmp.eq.s32.totalorder %s73, 0
      %s76 = sadd.s32 %s75, 1
      %s77 = scalar_select %p74, %s75, %s76
      %p80 = pneg %p74
      %p81 = scmp.eq.s32.totalorder %s25, 1
      %p82 = por %p80, %p81
      %p83 = scmp.ne.s32.totalorder %s75, %s78
      %p84 = scmp.eq.s32.totalorder %s25, 0
      %p85 = por %p83, %p84
      %p86 = scmp.ne.s32.totalorder %s75, %s78
      %p87 = scmp.eq.s32.totalorder %s30, 1
      %p88 = por %p86, %p87
      %p89 = scmp.ne.s32.totalorder %s78, %s79
      %p90 = scmp.eq.s32.totalorder %s30, 0
      %p91 = por %p89, %p90
      %p92 = scmp.ne.s32.totalorder %s78, %s79
      %p93 = scmp.eq.s32.totalorder %s31, 1
      %p94 = por %p92, %p93
      %p96 = scmp.ne.s32.totalorder %s79, %s95
      %p97 = scmp.eq.s32.totalorder %s31, 0
      %p98 = por %p96, %p97
      %s99 = ssub.s32 %s32, %s44
      %p100 = scmp.eq.s32.totalorder %s99, 0
      %s102 = sadd.s32 %s101, 1
      %s103 = scalar_select %p100, %s101, %s102
      %p106 = pneg %p100
      %p107 = scmp.eq.s32.totalorder %s25, 1
      %p108 = por %p106, %p107
      %p109 = scmp.ne.s32.totalorder %s101, %s104
      %p110 = scmp.eq.s32.totalorder %s25, 0
      %p111 = por %p109, %p110
      %p112 = scmp.ne.s32.totalorder %s101, %s104
      %p113 = scmp.eq.s32.totalorder %s30, 1
      %p114 = por %p112, %p113
      %p115 = scmp.ne.s32.totalorder %s104, %s105
      %p116 = scmp.eq.s32.totalorder %s30, 0
      %p117 = por %p115, %p116
      %p118 = scmp.ne.s32.totalorder %s104, %s105
      %p119 = scmp.eq.s32.totalorder %s31, 1
      %p120 = por %p118, %p119
      %p122 = scmp.ne.s32.totalorder %s105, %s121
      %p123 = scmp.eq.s32.totalorder %s31, 0
      %p124 = por %p122, %p123
      %s125 = ssub.s32 %s32, %s44
      %s126 = ssub.s32 %s33, %s40
      %s127 = sor.u32 %s125, %s126
      %p128 = scmp.eq.s32.totalorder %s127, 0
      %s130 = sadd.s32 %s129, 1
      %s131 = scalar_select %p128, %s129, %s130
      %p134 = pneg %p128
      %p135 = scmp.eq.s32.totalorder %s25, 1
      %p136 = por %p134, %p135
      %p137 = scmp.ne.s32.totalorder %s129, %s132
      %p138 = scmp.eq.s32.totalorder %s25, 0
      %p139 = por %p137, %p138
      %p140 = scmp.ne.s32.totalorder %s129, %s132
      %p141 = scmp.eq.s32.totalorder %s30, 1
      %p142 = por %p140, %p141
      %p143 = scmp.ne.s32.totalorder %s132, %s133
      %p144 = scmp.eq.s32.totalorder %s30, 0
      %p145 = por %p143, %p144
      %p146 = scmp.ne.s32.totalorder %s132, %s133
      %p147 = scmp.eq.s32.totalorder %s31, 1
      %p148 = por %p146, %p147
      %p150 = scmp.ne.s32.totalorder %s133, %s149
      %p151 = scmp.eq.s32.totalorder %s31, 0
      %p152 = por %p150, %p151
      %s153 = ssub.s32 %s32, %s44
      %s154 = ssub.s32 %s33, %s40
      %s155 = sor.u32 %s153, %s154
      %p156 = scmp.eq.s32.totalorder %s155, 0
      %s158 = sadd.s32 %s157, 1
      %s159 = scalar_select %p156, %s157, %s158
      %p162 = pneg %p156
      %p163 = scmp.eq.s32.totalorder %s25, 1
      %p164 = por %p162, %p163
      %p165 = scmp.ne.s32.totalorder %s157, %s160
      %p166 = scmp.eq.s32.totalorder %s25, 0
      %p167 = por %p165, %p166
      %p168 = scmp.ne.s32.totalorder %s157, %s160
      %p169 = scmp.eq.s32.totalorder %s30, 1
      %p170 = por %p168, %p169
      %p171 = scmp.ne.s32.totalorder %s160, %s161
      %p172 = scmp.eq.s32.totalorder %s30, 0
      %p173 = por %p171, %p172
      %p174 = scmp.ne.s32.totalorder %s160, %s161
      %p175 = scmp.eq.s32.totalorder %s31, 1
      %p176 = por %p174, %p175
      %p178 = scmp.ne.s32.totalorder %s161, %s177
      %p179 = scmp.eq.s32.totalorder %s31, 0
      %p180 = por %p178, %p179
      %s181 = ssub.s32 %s32, %s44
      %s182 = ssub.s32 %s33, %s40
      %s183 = sor.u32 %s181, %s182
      %p184 = scmp.eq.s32.totalorder %s183, 0
      %s186 = sadd.s32 %s185, 1
      %s187 = scalar_select %p184, %s185, %s186
      %p190 = pneg %p184
      %p191 = scmp.eq.s32.totalorder %s25, 1
      %p192 = por %p190, %p191
      %p193 = scmp.ne.s32.totalorder %s185, %s188
      %p194 = scmp.eq.s32.totalorder %s25, 0
      %p195 = por %p193, %p194
      %p196 = scmp.ne.s32.totalorder %s185, %s188
      %p197 = scmp.eq.s32.totalorder %s30, 1
      %p198 = por %p196, %p197
      %p199 = scmp.ne.s32.totalorder %s188, %s189
      %p200 = scmp.eq.s32.totalorder %s30, 0
      %p201 = por %p199, %p200
      %p202 = scmp.ne.s32.totalorder %s188, %s189
      %p203 = scmp.eq.s32.totalorder %s31, 1
      %p204 = por %p202, %p203
      %p206 = scmp.ne.s32.totalorder %s189, %s205
      %p207 = scmp.eq.s32.totalorder %s31, 0
      %p208 = por %p206, %p207
      %s209 = ssub.s32 %s32, %s44
      %s210 = ssub.s32 %s33, %s40
      %s211 = sor.u32 %s209, %s210
      %p212 = scmp.eq.s32.totalorder %s211, 0
      %s214 = sadd.s32 %s213, 1
      %s215 = scalar_select %p212, %s213, %s214
      %p218 = pneg %p212
      %p219 = scmp.eq.s32.totalorder %s25, 1
      %p220 = por %p218, %p219
      %p221 = scmp.ne.s32.totalorder %s213, %s216
      %p222 = scmp.eq.s32.totalorder %s25, 0
      %p223 = por %p221, %p222
      %p224 = scmp.ne.s32.totalorder %s213, %s216
      %p225 = scmp.eq.s32.totalorder %s30, 1
      %p226 = por %p224, %p225
      %p227 = scmp.ne.s32.totalorder %s216, %s217
      %p228 = scmp.eq.s32.totalorder %s30, 0
      %p229 = por %p227, %p228
      %p230 = scmp.ne.s32.totalorder %s216, %s217
      %p231 = scmp.eq.s32.totalorder %s31, 1
      %p232 = por %p230, %p231
      %p234 = scmp.ne.s32.totalorder %s217, %s233
      %p235 = scmp.eq.s32.totalorder %s31, 0
      %p236 = por %p234, %p235
      %p237 = scmp.le.s32.totalorder 1, %s25
      %p238 = scmp.lt.s32.totalorder %s25, 3
      %p239 = pnand %p237, %p238
      %p240 = pneg %p239
      // Predicated region
      $region9: #{tpu_custom_call.1} parent=5 // pred_check
        _
      $region10: #{tpu_custom_call.1} parent=5 // pred_check_branch
        %242 = sbr.rel (%p239) target = $region12
      $region11: #{tpu_custom_call.1} parent=5 // pred_region
        %s243 = ssub.s32 %s25, 1
      $region12: #{tpu_custom_call.1} parent=5 // pred_fallthru
        _
      %p244 = scmp.lt.s32.totalorder %s25, 2
      // Predicated region
      $region13: #{tpu_custom_call.1} parent=5 // pred_check
        %p245 = pneg %p244
      $region14: #{tpu_custom_call.1} parent=5 // pred_check_branch
        %247 = sbr.rel (%p245) target = $region16
      $region15: #{tpu_custom_call.1} parent=5 // pred_region
        // Predicated region
        $region17: #{tpu_custom_call.1} parent=15 // pred_check
          %p248 = pneg %p59
        $region18: #{tpu_custom_call.1} parent=15 // pred_check_branch
          %250 = sbr.rel (%p248) target = $region20
        $region19: #{tpu_custom_call.1} parent=15 // pred_region
          %s251 = sand.u32 %s49, 1
          %s252 = scalar_lea.sflag [#allocation3], %s251
          %s253 = sand.u32 %s49, 1
          %s254 = smul.addr %s253, 8
          %s255 = scalar_lea.vmem [#allocation2], %s254
          %s257 = ssub.s32 128, 128
          %258 = vsyncadd %s252, %s257
          %s259 = sadd.s32 %s33, %s32
          %s260 = smul.addr %s259, 128
          %s261 = scalar_lea.hbm %s0, %s260
          %s263 = sshll.u32 %s255, 4
          %s264 = int_to_ptr.vmem [resolvable:$true] %s263
          %266 = dma.hbm_to_vmem [thread:$0]  %s261, 128, %s264, %s252
        $region20: #{tpu_custom_call.1} parent=15 // pred_fallthru
          _
        // Predicated region
        $region21: #{tpu_custom_call.1} parent=15 // pred_check
          %p267 = pneg %p85
        $region22: #{tpu_custom_call.1} parent=15 // pred_check_branch
          %269 = sbr.rel (%p267) target = $region24
        $region23: #{tpu_custom_call.1} parent=15 // pred_region
          %s270 = sand.u32 %s25, 1
          %s271 = scalar_lea.sflag [#allocation6], %s270
          %s272 = sand.u32 %s75, 1
          %s273 = smul.addr %s272, 8
          %s274 = scalar_lea.vmem [#allocation5], %s273
          %s276 = ssub.s32 128, 128
          %277 = vsyncadd %s271, %s276
          %s278 = smul.addr %s32, 128
          %s279 = scalar_lea.hbm %s1, %s278
          %s281 = sshll.u32 %s274, 4
          %s282 = int_to_ptr.vmem [resolvable:$true] %s281
          %284 = dma.hbm_to_vmem [thread:$0]  %s279, 128, %s282, %s271
        $region24: #{tpu_custom_call.1} parent=15 // pred_fallthru
          _
        // Predicated region
        $region25: #{tpu_custom_call.1} parent=15 // pred_check
          %p285 = pneg %p111
        $region26: #{tpu_custom_call.1} parent=15 // pred_check_branch
          %287 = sbr.rel (%p285) target = $region28
        $region27: #{tpu_custom_call.1} parent=15 // pred_region
          %s288 = sand.u32 %s25, 1
          %s289 = scalar_lea.sflag [#allocation6], %s288
          %s290 = sand.u32 %s101, 1
          %s291 = smul.addr %s290, 8
          %s292 = scalar_lea.vmem [#allocation7], %s291
          %s294 = ssub.s32 128, 128
          %295 = vsyncadd %s289, %s294
          %s296 = smul.addr %s32, 128
          %s297 = scalar_lea.hbm %s2, %s296
          %s299 = sshll.u32 %s292, 4
          %s300 = int_to_ptr.vmem [resolvable:$true] %s299
          %302 = dma.hbm_to_vmem [thread:$0]  %s297, 128, %s300, %s289
        $region28: #{tpu_custom_call.1} parent=15 // pred_fallthru
          _
        // Predicated region
        $region29: #{tpu_custom_call.1} parent=15 // pred_check
          %p303 = pneg %p139
        $region30: #{tpu_custom_call.1} parent=15 // pred_check_branch
          %305 = sbr.rel (%p303) target = $region32
        $region31: #{tpu_custom_call.1} parent=15 // pred_region
          %p306 = scmp.lt.s32.totalorder %s32, 1
          %s307 = scalar_select %p306, %s32, 1
          %p308 = scmp.lt.s32.totalorder %s33, 0
          %s309 = scalar_select %p308, %s33, 0
          %s310 = sadd.s32 %s309, %s307
          %s311 = smul.addr %s310, 2
          %s312 = scalar_lea.vmem %s3, %s311
        $region32: #{tpu_custom_call.1} parent=15 // pred_fallthru
          _
        // Predicated region
        $region33: #{tpu_custom_call.1} parent=15 // pred_check
          %p313 = pneg %p167
        $region34: #{tpu_custom_call.1} parent=15 // pred_check_branch
          %315 = sbr.rel (%p313) target = $region36
        $region35: #{tpu_custom_call.1} parent=15 // pred_region
          %p316 = scmp.lt.s32.totalorder %s32, 1
          %s317 = scalar_select %p316, %s32, 1
          %p318 = scmp.lt.s32.totalorder %s33, 0
          %s319 = scalar_select %p318, %s33, 0
          %s320 = sadd.s32 %s319, %s317
          %s321 = smul.addr %s320, 2
          %s322 = scalar_lea.vmem %s4, %s321
        $region36: #{tpu_custom_call.1} parent=15 // pred_fallthru
          _
      $region16: #{tpu_custom_call.1} parent=5 // pred_fallthru
        _
      %p323 = scmp.le.s32.totalorder 1, %s25
      %p324 = scmp.lt.s32.totalorder %s25, 3
      %p325 = pnand %p323, %p324
      %p326 = pneg %p325
      // Predicated region
      $region37: #{tpu_custom_call.1} parent=5 // pred_check
        _
      $region38: #{tpu_custom_call.1} parent=5 // pred_check_branch
        %328 = sbr.rel (%p325) target = $region40
      $region39: #{tpu_custom_call.1} parent=5 // pred_region
        %s329 = ssub.s32 %s25, 1
        %s330 = sand.u32 %s52, 1
        %s331 = scalar_lea.sflag [#allocation3], %s330
        %s332 = sand.u32 %s52, 1
        %s333 = smul.addr %s332, 8
        %s334 = scalar_lea.vmem [#allocation2], %s333
        // Predicated region
        $region41: #{tpu_custom_call.1} parent=39 // pred_check
          %p335 = pneg %p65
        $region42: #{tpu_custom_call.1} parent=39 // pred_check_branch
          %337 = sbr.rel (%p335) target = $region44
        $region43: #{tpu_custom_call.1} parent=39 // pred_region
          %338 = dma.done %s331, 128
        $region44: #{tpu_custom_call.1} parent=39 // pred_fallthru
          _
        %s339 = sand.u32 %s30, 1
        %s340 = scalar_lea.sflag [#allocation6], %s339
        %s341 = sand.u32 %s78, 1
        %s342 = smul.addr %s341, 8
        %s343 = scalar_lea.vmem [#allocation5], %s342
        // Predicated region
        $region45: #{tpu_custom_call.1} parent=39 // pred_check
          %p344 = pneg %p91
        $region46: #{tpu_custom_call.1} parent=39 // pred_check_branch
          %346 = sbr.rel (%p344) target = $region48
        $region47: #{tpu_custom_call.1} parent=39 // pred_region
          %347 = dma.done %s340, 128
        $region48: #{tpu_custom_call.1} parent=39 // pred_fallthru
          _
        %s348 = sand.u32 %s30, 1
        %s349 = scalar_lea.sflag [#allocation6], %s348
        %s350 = sand.u32 %s104, 1
        %s351 = smul.addr %s350, 8
        %s352 = scalar_lea.vmem [#allocation7], %s351
        // Predicated region
        $region49: #{tpu_custom_call.1} parent=39 // pred_check
          %p353 = pneg %p117
        $region50: #{tpu_custom_call.1} parent=39 // pred_check_branch
          %355 = sbr.rel (%p353) target = $region52
        $region51: #{tpu_custom_call.1} parent=39 // pred_region
          %356 = dma.done %s349, 128
        $region52: #{tpu_custom_call.1} parent=39 // pred_fallthru
          _
        %s357 = sand.u32 %s52, 1
        %s358 = scalar_lea.sflag [#allocation3], %s357
        %s359 = sand.u32 %s52, 1
        %s360 = smul.addr %s359, 8
        %s361 = scalar_lea.vmem [#allocation2], %s360
        %p362 = pneg %p65
        %p363 = pneg %p62
        %s364 = sand.u32 %s30, 1
        %s365 = scalar_lea.sflag [#allocation6], %s364
        %s366 = sand.u32 %s78, 1
        %s367 = smul.addr %s366, 8
        %s368 = scalar_lea.vmem [#allocation5], %s367
        %p369 = pneg %p91
        %p370 = pneg %p88
        %s371 = sand.u32 %s30, 1
        %s372 = scalar_lea.sflag [#allocation6], %s371
        %s373 = sand.u32 %s104, 1
        %s374 = smul.addr %s373, 8
        %s375 = scalar_lea.vmem [#allocation7], %s374
        %p376 = pneg %p117
        %p377 = pneg %p114
        %p378 = scmp.lt.s32.totalorder %s34, 1
        %s379 = scalar_select %p378, %s34, 1
        %p380 = scmp.lt.s32.totalorder %s35, 0
        %s381 = scalar_select %p380, %s35, 0
        %s382 = sadd.s32 %s381, %s379
        %s383 = smul.addr %s382, 2
        %s384 = scalar_lea.vmem %s3, %s383
        %p385 = pneg %p145
        %p386 = pneg %p142
        %p387 = scmp.lt.s32.totalorder %s34, 1
        %s388 = scalar_select %p387, %s34, 1
        %p389 = scmp.lt.s32.totalorder %s35, 0
        %s390 = scalar_select %p389, %s35, 0
        %s391 = sadd.s32 %s390, %s388
        %s392 = smul.addr %s391, 2
        %s393 = scalar_lea.vmem %s4, %s392
        %p394 = pneg %p173
        %p395 = pneg %p170
        %p396 = pneg %p201
        %p397 = pneg %p198
        %s398 = sand.u32 %s188, 1
        %s399 = scalar_lea.sflag [#allocation4], %s398
        %s400 = sand.u32 %s188, 1
        %s401 = smul.addr %s400, 8
        %s402 = scalar_lea.vmem [#allocation8], %s401
        %p403 = pneg %p229
        %p404 = pneg %p226
        %s405 = sand.u32 %s216, 1
        %s406 = scalar_lea.sflag [#allocation10], %s405
        %s407 = sand.u32 %s216, 1
        %s408 = smul.addr %s407, 8
        %s409 = scalar_lea.vmem [#allocation9], %s408
        %p410 = scmp.lt.s32.totalorder %s34, 1
        %s411 = scalar_select %p410, %s34, 1
        %p412 = scmp.lt.s32.totalorder %s35, 0
        %s413 = scalar_select %p412, %s35, 0
        %s414 = sadd.s32 %s413, %s411
        %s415 = smul.addr %s414, 2
        %s416 = scalar_lea.vmem %s3, %s415
        %p417 = scmp.lt.s32.totalorder %s34, 1
        %s418 = scalar_select %p417, %s34, 1
        %p419 = scmp.lt.s32.totalorder %s35, 0
        %s420 = scalar_select %p419, %s35, 0
        %s421 = sadd.s32 %s420, %s418
        %s422 = smul.addr %s421, 2
        %s423 = scalar_lea.vmem %s4, %s422
        %v426 = vld [vmem:[%s334] sm:$0xff]
        %v427 = vld [vmem:[%s343] sm:$0xff]
        %v428 = vld [vmem:[%s352] sm:$0xff]
        %v429 = vld [vmem:[%s416] sm:$0x3]
        %v430 = vld [vmem:[%s423] sm:$0x3]
        %v431 = vmul.f32 %v426, 0.17677669
        %vm432 = vcmask 261120
        %v434 = vsel %vm432, %v431, 0
        %v437 = vsel %vm432, %v427, 0
        %439 = vmatprep.subr.mxu0 0.0
        %440 = vmatpush1.xpose.msra.mxu0 0.0
        %441 = vmatprep.subr.mxu0 0.0
        %442 = vmatpush1.xpose.msra.mxu0 0.0
        %443 = vmatprep.subr.mxu0 0.0
        %444 = vmatpush1.xpose.msra.mxu0 0.0
        %445 = vmatprep.subr.mxu0 0.0
        %446 = vmatpush1.xpose.msra.mxu0 0.0
        %447 = vmatprep.subr.mxu0 0.0
        %448 = vmatpush1.xpose.msra.mxu0 0.0
        %449 = vmatprep.subr.mxu0 0.0
        %450 = vmatpush1.xpose.msra.mxu0 0.0
        %451 = vmatprep.subr.mxu0 0.0
        %452 = vmatpush1.xpose.msra.mxu0 0.0
        %453 = vmatprep.subr.mxu0 0.0
        %454 = vmatpush1.xpose.msra.mxu0 0.0
        %455 = vmatprep.subr.mxu0 0.0
        %456 = vmatpush1.xpose.msra.mxu0 0.0
        %457 = vmatprep.subr.mxu0 0.0
        %458 = vmatpush1.xpose.msra.mxu0 0.0
        %459 = vmatprep.subr.mxu0 0.0
        %460 = vmatpush1.xpose.msra.mxu0 0.0
        %461 = vmatprep.subr.mxu0 0.0
        %462 = vmatpush1.xpose.msra.mxu0 0.0
        %463 = vmatprep.subr.mxu0 0.0
        %464 = vmatpush1.xpose.msra.mxu0 0.0
        %465 = vmatprep.subr.mxu0 0.0
        %466 = vmatpush1.xpose.msra.mxu0 0.0
        %467 = vmatprep.subr.mxu0 0.0
        %468 = vmatpush1.xpose.msra.mxu0 0.0
        %469 = vmatprep.subr.mxu0 0.0
        %470 = vmatpush1.xpose.msra.mxu0 %v437
        %471 = vmatprep.subr.mxu0 0.0
        %472 = vmatpush2.xpose.msra.mxu0 0.0
        %473 = vmatprep.subr.mxu0 0.0
        %474 = vmatpush2.xpose.msra.mxu0 0.0
        %475 = vmatprep.subr.mxu0 0.0
        %476 = vmatpush2.xpose.msra.mxu0 0.0
        %477 = vmatprep.subr.mxu0 0.0
        %478 = vmatpush2.xpose.msra.mxu0 0.0
        %479 = vmatprep.subr.mxu0 0.0
        %480 = vmatpush2.xpose.msra.mxu0 0.0
        %481 = vmatprep.subr.mxu0 0.0
        %482 = vmatpush2.xpose.msra.mxu0 0.0
        %483 = vmatprep.subr.mxu0 0.0
        %484 = vmatpush2.xpose.msra.mxu0 0.0
        %485 = vmatprep.subr.mxu0 0.0
        %486 = vmatpush2.xpose.msra.mxu0 0.0
        %487 = vmatprep.subr.mxu0 0.0
        %488 = vmatpush2.xpose.msra.mxu0 0.0
        %489 = vmatprep.subr.mxu0 0.0
        %490 = vmatpush2.xpose.msra.mxu0 0.0
        %491 = vmatprep.subr.mxu0 0.0
        %492 = vmatpush2.xpose.msra.mxu0 0.0
        %493 = vmatprep.subr.mxu0 0.0
        %494 = vmatpush2.xpose.msra.mxu0 0.0
        %495 = vmatprep.subr.mxu0 0.0
        %496 = vmatpush2.xpose.msra.mxu0 0.0
        %497 = vmatprep.subr.mxu0 0.0
        %498 = vmatpush2.xpose.msra.mxu0 0.0
        %499 = vmatprep.subr.mxu0 0.0
        %500 = vmatpush2.xpose.msra.mxu0 0.0
        %501 = vmatprep.subr.mxu0 0.0
        %502 = vmatpush2.xpose.msra.mxu0 0.0
        %503 = vmatprep.mubr.f32.mxu0 0.0
        %504 = vmatmul.mubr.f32.gmra.mxu0 %v434
        %v505 = vpop.f32.mrf.mxu0
        %v506 = vadd.f32 0.0, %v505
        %v507 = vpop.f32.mrf.mxu0
        %508 = vdwg.mxu0
        %vm509 = vnez %v429
        %v510 = vsel %vm509, 16843009, 0
        %v511 = vunpack.c.0.s8 %v510
        %vm512 = vcmp.ne.s32.totalorder %v511, 0
        %v513 = vsel %vm512, -inf, %v506
        %vm514 = vcmask 64512
        %v515 = vsel %vm514, %v513, -inf
        %516 = vmax.xlane.f32.xlu0 %v515
        %v517 = vpop.xlane.xlu0 %516
        %v518 = vsub.f32 %v513, %v517
        %v519 = vmul.f32 %v518, 1.442695
        %v520 = vpow.pop %v519
        %v521 = vsel %vm514, %v520, 0.0
        %522 = vadd.xlane.f32.xlu0 %v521
        %v523 = vpop.xlane.xlu0 %522
        %v524 = vrcp.pop %v523
        %v525 = vmul.f32 %v520, %v524
        %v527 = vsel %vm514, %v525, 0
        %529 = vmatprep.subr.mxu0 0.0
        %530 = vmatpush1.msra.mxu0 0.0
        %531 = vmatprep.subr.mxu0 0.0
        %532 = vmatpush1.msra.mxu0 0.0
        %533 = vmatprep.subr.mxu0 0.0
        %534 = vmatpush1.msra.mxu0 0.0
        %535 = vmatprep.subr.mxu0 0.0
        %536 = vmatpush1.msra.mxu0 0.0
        %537 = vmatprep.subr.mxu0 0.0
        %538 = vmatpush1.msra.mxu0 0.0
        %539 = vmatprep.subr.mxu0 0.0
        %540 = vmatpush1.msra.mxu0 0.0
        %541 = vmatprep.subr.mxu0 0.0
        %542 = vmatpush1.msra.mxu0 0.0
        %543 = vmatprep.subr.mxu0 0.0
        %544 = vmatpush1.msra.mxu0 0.0
        %545 = vmatprep.subr.mxu0 0.0
        %546 = vmatpush1.msra.mxu0 0.0
        %547 = vmatprep.subr.mxu0 0.0
        %548 = vmatpush1.msra.mxu0 0.0
        %549 = vmatprep.subr.mxu0 0.0
        %550 = vmatpush1.msra.mxu0 0.0
        %551 = vmatprep.subr.mxu0 0.0
        %552 = vmatpush1.msra.mxu0 0.0
        %553 = vmatprep.subr.mxu0 0.0
        %554 = vmatpush1.msra.mxu0 0.0
        %555 = vmatprep.subr.mxu0 0.0
        %556 = vmatpush1.msra.mxu0 0.0
        %557 = vmatprep.subr.mxu0 0.0
        %558 = vmatpush1.msra.mxu0 0.0
        %559 = vmatprep.subr.mxu0 0.0
        %560 = vmatpush1.msra.mxu0 %v428
        %561 = vmatprep.subr.mxu0 0.0
        %562 = vmatpush2.msra.mxu0 0.0
        %563 = vmatprep.subr.mxu0 0.0
        %564 = vmatpush2.msra.mxu0 0.0
        %565 = vmatprep.subr.mxu0 0.0
        %566 = vmatpush2.msra.mxu0 0.0
        %567 = vmatprep.subr.mxu0 0.0
        %568 = vmatpush2.msra.mxu0 0.0
        %569 = vmatprep.subr.mxu0 0.0
        %570 = vmatpush2.msra.mxu0 0.0
        %571 = vmatprep.subr.mxu0 0.0
        %572 = vmatpush2.msra.mxu0 0.0
        %573 = vmatprep.subr.mxu0 0.0
        %574 = vmatpush2.msra.mxu0 0.0
        %575 = vmatprep.subr.mxu0 0.0
        %576 = vmatpush2.msra.mxu0 0.0
        %577 = vmatprep.subr.mxu0 0.0
        %578 = vmatpush2.msra.mxu0 0.0
        %579 = vmatprep.subr.mxu0 0.0
        %580 = vmatpush2.msra.mxu0 0.0
        %581 = vmatprep.subr.mxu0 0.0
        %582 = vmatpush2.msra.mxu0 0.0
        %583 = vmatprep.subr.mxu0 0.0
        %584 = vmatpush2.msra.mxu0 0.0
        %585 = vmatprep.subr.mxu0 0.0
        %586 = vmatpush2.msra.mxu0 0.0
        %587 = vmatprep.subr.mxu0 0.0
        %588 = vmatpush2.msra.mxu0 0.0
        %589 = vmatprep.subr.mxu0 0.0
        %590 = vmatpush2.msra.mxu0 0.0
        %591 = vmatprep.subr.mxu0 0.0
        %592 = vmatpush2.msra.mxu0 0.0
        %593 = vmatprep.mubr.f32.mxu0 0.0
        %594 = vmatmul.mubr.f32.gmra.mxu0 %v527
        %v595 = vpop.f32.mrf.mxu0
        %v596 = vadd.f32 0.0, %v595
        %v597 = vpop.f32.mrf.mxu0
        %598 = vdwg.mxu0
        %vm599 = vnez %v430
        %v600 = vsel %vm599, 16843009, 0
        %v601 = vunpack.c.0.s8 %v600
        %vm602 = vcmp.ne.s32.totalorder %v601, 0
        %v603 = vsel %vm602, 1, 0
        %604 = vset.pattern.permute.xlu0 0
        %605 = vperm.xlu0 %604, %v603
        %v606 = vpop.permute.xlu0 %605
        %vm607 = vcmp.eq.s32.totalorder %v606, 1
        %v608 = vsel %vm607, 0.0, %v596
        %609 = vst.msk [vmem:[%s402] sm:$0xff] %vm432, %v608
        %610 = vst.msk [vmem:[%s409] sm:$0xff] %vm514, %v525
        %s611 = sand.u32 %s188, 1
        %s612 = scalar_lea.sflag [#allocation4], %s611
        %s613 = sand.u32 %s188, 1
        %s614 = smul.addr %s613, 8
        %s615 = scalar_lea.vmem [#allocation8], %s614
        %s616 = sand.u32 %s216, 1
        %s617 = scalar_lea.sflag [#allocation10], %s616
        %s618 = sand.u32 %s216, 1
        %s619 = smul.addr %s618, 8
        %s620 = scalar_lea.vmem [#allocation9], %s619
        // Predicated region
        $region53: #{tpu_custom_call.1} parent=39 // pred_check
          %p621 = pneg %p198
        $region54: #{tpu_custom_call.1} parent=39 // pred_check_branch
          %623 = sbr.rel (%p621) target = $region56
        $region55: #{tpu_custom_call.1} parent=39 // pred_region
          %s625 = ssub.s32 128, 128
          %626 = vsyncadd %s612, %s625
          %s627 = sadd.s32 %s35, %s34
          %s628 = smul.addr %s627, 128
          %s629 = scalar_lea.hbm %s5, %s628
          %s631 = sshll.u32 %s615, 4
          %s632 = int_to_ptr.vmem [resolvable:$true] %s631
          %634 = dma.vmem_to_hbm [thread:$0]  %s632, 128, %s629, %s612
        $region56: #{tpu_custom_call.1} parent=39 // pred_fallthru
          _
        // Predicated region
        $region57: #{tpu_custom_call.1} parent=39 // pred_check
          %p635 = pneg %p226
        $region58: #{tpu_custom_call.1} parent=39 // pred_check_branch
          %637 = sbr.rel (%p635) target = $region60
        $region59: #{tpu_custom_call.1} parent=39 // pred_region
          %s639 = ssub.s32 128, 128
          %640 = vsyncadd %s617, %s639
          %s641 = sadd.s32 %s35, %s34
          %s642 = smul.addr %s641, 128
          %s643 = scalar_lea.hbm %s6, %s642
          %s645 = sshll.u32 %s620, 4
          %s646 = int_to_ptr.vmem [resolvable:$true] %s645
          %648 = dma.vmem_to_hbm [thread:$0]  %s646, 128, %s643, %s617
        $region60: #{tpu_custom_call.1} parent=39 // pred_fallthru
          _
      $region40: #{tpu_custom_call.1} parent=5 // pred_fallthru
        _
      %p649 = scmp.le.s32.totalorder 2, %s25
      // Predicated region
      $region61: #{tpu_custom_call.1} parent=5 // pred_check
        %p650 = pneg %p649
      $region62: #{tpu_custom_call.1} parent=5 // pred_check_branch
        %652 = sbr.rel (%p650) target = $region64
      $region63: #{tpu_custom_call.1} parent=5 // pred_region
        %s653 = ssub.s32 %s25, 2
        // Predicated region
        $region65: #{tpu_custom_call.1} parent=63 // pred_check
          %p654 = pneg %p204
        $region66: #{tpu_custom_call.1} parent=63 // pred_check_branch
          %656 = sbr.rel (%p654) target = $region68
        $region67: #{tpu_custom_call.1} parent=63 // pred_region
          %s657 = sand.u32 %s189, 1
          %s658 = scalar_lea.sflag [#allocation4], %s657
          %s659 = sand.u32 %s189, 1
          %s660 = smul.addr %s659, 8
          %s661 = scalar_lea.vmem [#allocation8], %s660
          %662 = dma.done %s658, 128
        $region68: #{tpu_custom_call.1} parent=63 // pred_fallthru
          _
        // Predicated region
        $region69: #{tpu_custom_call.1} parent=63 // pred_check
          %p663 = pneg %p232
        $region70: #{tpu_custom_call.1} parent=63 // pred_check_branch
          %665 = sbr.rel (%p663) target = $region72
        $region71: #{tpu_custom_call.1} parent=63 // pred_region
          %s666 = sand.u32 %s217, 1
          %s667 = scalar_lea.sflag [#allocation10], %s666
          %s668 = sand.u32 %s217, 1
          %s669 = smul.addr %s668, 8
          %s670 = scalar_lea.vmem [#allocation9], %s669
          %671 = dma.done %s667, 128
        $region72: #{tpu_custom_call.1} parent=63 // pred_fallthru
          _
      $region64: #{tpu_custom_call.1} parent=5 // pred_fallthru
        _
    $region6: #{tpu_custom_call.1} parent=1 // loop_footer
      %s29 = sadd.s32 1, %s25
    $region7: #{tpu_custom_call.1} parent=1 // loop_footer_branch
      %24 = sbr.rel target = $region3
    $region8: #{tpu_custom_call.1} parent=1 // loop_exit
      _
    %672 = vsyncpa [#allocation3], 1
    %s673 = scalar_lea.sflag [#allocation3], 1
    %674 = vsyncpa %s673, 1
    %675 = vsyncpa [#allocation6], 1
    %s676 = scalar_lea.sflag [#allocation6], 1
    %677 = vsyncpa %s676, 1
    %678 = vsyncpa [#allocation4], 1
    %s679 = scalar_lea.sflag [#allocation4], 1
    %680 = vsyncpa %s679, 1
    %681 = vsyncpa [#allocation10], 1
    %s682 = scalar_lea.sflag [#allocation10], 1
    %683 = vsyncpa %s682, 1

</llo_original>
